<compile_context>
chip_gen: v5e
topology: v5e:2x2
jax: 0.10.0
libtpu: 0.0.40
codegen_flags: <defaults>
</compile_context>

<pallas_src>
import jax
import jax.numpy as jnp
from jax.experimental import pallas as pl
from jax.experimental.pallas import tpu as pltpu


def _round_up(n, m):
    return ((n + m - 1) // m) * m


def _linear_kernel(x_ref, w_ref, b_ref, o_ref):
    # x_ref: (C, TB)  -- batch on lanes (lane-dense)
    # w_ref: (C, 1)   -- resident, constant index_map
    # b_ref: (1, 1)
    # o_ref: (1, TB)  -- lane-dense output slab
    x = x_ref[...]
    w = w_ref[...]                       # (C, 1), lane-broadcast against x
    b = b_ref[...]                       # (1, 1)
    # VPU multiply + small (10-sublane) reduction; bias folded in. No MXU.
    y = jnp.sum(x * w, axis=0, keepdims=True) + b          # (1, TB), f32
    o_ref[...] = y.astype(o_ref.dtype)


def classifier_forward(x, weight, bias, *, tb_max=2048):
    """x: (B, context) f32; weight: (1, context) f32 (PyTorch layout); bias: (1,) f32.

    Returns (B, 1) f32, identical to nn.Linear(context, 1)(x).
    """
    B, C = x.shape

    # Batch tile: multiple of 128 lanes, capped so double-buffered blocks stay tiny.
    TB = min(tb_max, _round_up(B, 128))
    B_pad = _round_up(B, TB)
    num_tiles = B_pad // TB

    # (C, B_pad) lane-dense input; zero-pad the ragged tail (padded outputs are
    # discarded below).  TODO(synk): have the producer emit (context, batch)
    # directly to avoid this transpose pass.
    xt = jnp.pad(x.T, ((0, 0), (0, B_pad - B)))

    w_col = weight.reshape(C, 1)          # (context, 1)
    b2d = bias.reshape(1, 1)              # (1, 1)

    out = pl.pallas_call(
        _linear_kernel,
        out_shape=jax.ShapeDtypeStruct((1, B_pad), x.dtype),
        grid_spec=pltpu.PrefetchScalarGridSpec(
            num_scalar_prefetch=0,
            grid=(num_tiles,),
            in_specs=[
                pl.BlockSpec((C, TB), lambda i: (0, i)),   # x tile, batch on lanes
                pl.BlockSpec((C, 1), lambda i: (0, 0)),    # weight, resident
                pl.BlockSpec((1, 1), lambda i: (0, 0)),    # bias, resident
            ],
            out_specs=pl.BlockSpec((1, TB), lambda i: (0, i)),
        ),
        compiler_params=pltpu.CompilerParams(
            dimension_semantics=("parallel",),
        ),
    )(xt, w_col, b2d)

    return out[0, :B].reshape(B, 1)


def init_params(key, context=10):
    """Deterministic init mimicking nn.Linear defaults (uniform +/- 1/sqrt(fan_in))."""
    kw, kb = jax.random.split(key)
    bound = 1.0 / jnp.sqrt(jnp.float32(context))
    weight = jax.random.uniform(kw, (1, context), jnp.float32, -bound, bound)
    bias = jax.random.uniform(kb, (1,), jnp.float32, -bound, bound)
    return weight, bias


if __name__ == "__main__":
    context = 10
    batch = 8

    key = jax.random.PRNGKey(0)
    kx, kp, kx2 = jax.random.split(key, 3)

    weight, bias = init_params(kp, context)

    # Small deployed-size batch.
    x = jax.random.normal(kx, (batch, context), jnp.float32)
    out = jax.block_until_ready(classifier_forward(x, weight, bias))
    ref = x @ weight.T + bias
    assert out.shape == (batch, 1)
    assert jnp.allclose(out, ref, atol=1e-5, rtol=1e-5)

    # Ragged batch (exercises the padded tail of the last tile).
    x2 = jax.random.normal(kx2, (300, context), jnp.float32)
    out2 = jax.block_until_ready(classifier_forward(x2, weight, bias))
    ref2 = x2 @ weight.T + bias
    assert out2.shape == (300, 1)
    assert jnp.allclose(out2, ref2, atol=1e-5, rtol=1e-5)

    print("KERNEL_OK")
</pallas_src>

<mosaic_0001>
module attributes {stable_mosaic.version = 11 : i64} {
  func.func @_linear_kernel(%arg0: i32, %arg1: memref<10x128xf32, #tpu.memory_space<vmem>>, %arg2: memref<10x1xf32, #tpu.memory_space<vmem>>, %arg3: memref<1x1xf32, #tpu.memory_space<vmem>>, %arg4: memref<1x128xf32, #tpu.memory_space<vmem>>) attributes {dimension_semantics = [#tpu.dimension_semantics<parallel>], iteration_bounds = array<i64: 1>, scalar_prefetch = 0 : i64, scratch_operands = 0 : i64, tpu.core_type = #tpu.core_type<tc>, window_params = [{transform_indices = @transform_0, window_bounds = array<i64: 10, 128>}, {pipeline_mode = #tpu.pipeline_mode<synchronous>, transform_indices = @transform_1, window_bounds = array<i64: 10, 1>}, {pipeline_mode = #tpu.pipeline_mode<synchronous>, transform_indices = @transform_2, window_bounds = array<i64: 1, 1>}, {transform_indices = @transform_3, window_bounds = array<i64: 1, 128>}]} {
    %c0 = arith.constant 0 : index
    %c0_0 = arith.constant 0 : index
    %0 = vector.load %arg1[%c0, %c0_0] : memref<10x128xf32, #tpu.memory_space<vmem>>, vector<10x128xf32>
    %c0_1 = arith.constant 0 : index
    %c0_2 = arith.constant 0 : index
    %1 = vector.load %arg2[%c0_1, %c0_2] : memref<10x1xf32, #tpu.memory_space<vmem>>, vector<10x1xf32>
    %c0_3 = arith.constant 0 : index
    %c0_4 = arith.constant 0 : index
    %2 = vector.load %arg3[%c0_3, %c0_4] : memref<1x1xf32, #tpu.memory_space<vmem>>, vector<1x1xf32>
    %3 = vector.broadcast %1 : vector<10x1xf32> to vector<10x128xf32>
    %4 = arith.mulf %0, %3 : vector<10x128xf32>
    %cst = arith.constant dense<0.000000e+00> : vector<128xf32>
    %5 = vector.multi_reduction <add>, %4, %cst [0] : vector<10x128xf32> to vector<128xf32>
    %6 = vector.shape_cast %5 : vector<128xf32> to vector<1x128xf32>
    %7 = vector.broadcast %2 : vector<1x1xf32> to vector<1x128xf32>
    %8 = arith.addf %6, %7 : vector<1x128xf32>
    %c0_5 = arith.constant 0 : index
    %c0_6 = arith.constant 0 : index
    %9 = vector.load %arg4[%c0_5, %c0_6] : memref<1x128xf32, #tpu.memory_space<vmem>>, vector<1x128xf32>
    tpu.vector_store %arg4[%c0_5, %c0_6], %8 {strides = array<i32>} : memref<1x128xf32, #tpu.memory_space<vmem>>, vector<1x128xf32>,
    return
  }
  func.func @transform_0(%arg0: i32) -> (i32, i32) {
    %c0_i32 = arith.constant 0 : i32
    %c0_i32_0 = arith.constant 0 : i32
    return %c0_i32, %arg0 : i32, i32
  }
  func.func @transform_1(%arg0: i32) -> (i32, i32) {
    %c0_i32 = arith.constant 0 : i32
    %c0_i32_0 = arith.constant 0 : i32
    %c0_i32_1 = arith.constant 0 : i32
    return %c0_i32, %c0_i32_0 : i32, i32
  }
  func.func @transform_2(%arg0: i32) -> (i32, i32) {
    %c0_i32 = arith.constant 0 : i32
    %c0_i32_0 = arith.constant 0 : i32
    %c0_i32_1 = arith.constant 0 : i32
    return %c0_i32, %c0_i32_0 : i32, i32
  }
  func.func @transform_3(%arg0: i32) -> (i32, i32) {
    %c0_i32 = arith.constant 0 : i32
    %c0_i32_0 = arith.constant 0 : i32
    return %c0_i32, %arg0 : i32, i32
  }
}

</mosaic_0001>

<llo_original>
// kernel: tpu_custom_call.1
$region0: #{tpu_custom_call.1}
  #allocation0 [shape = 'u32[]', space=smem, size = 0x4, offset = 0x4, fixed_abs, tag = 'smem constant byte address 0x4 - core index']
  #allocation1 [shape = 'u32[72,128]{1,0:T(1,128)}', space=vmem, size = 0x9000, scoped, tag = 'internal scratch']
  #allocation2 [shape = 'f32[1,1]{1,0:T(1,128)S(1)}', space=vmem, size = 0x200, scoped, tag = 'scoped memory for tpu_custom_call.1']
  %s0 = inlined_call_operand.vmem [shape: f32[10,128], index: 0, kind: input, shape index: {}]
  %s1 = inlined_call_operand.vmem [shape: f32[10,1], index: 1, kind: input, shape index: {}]
  %s2 = inlined_call_operand.<no memory space> [shape: f32[1,1], index: 2, kind: input, shape index: {}]
  %s3 = inlined_call_operand.hbm [shape: f32[1,128], index: 3, kind: output, shape index: {}]
  %s4 = sld [smem:[#allocation0]]
  $region22: #{tpu_custom_call.1} parent=0
    _
  %s6 = ssub.s32 1, %s4
  %s7 = scalar_select 0, %s6, %s4
  %v8 = vstv %s2
  %9 = vst [vmem:[#allocation2] sm:$0x1] %v8
  $region1: #{tpu_custom_call.1} parent=0
    #allocation3 [shape = 'u8[512]{0}', space=vmem, size = 0x400, scoped, tag = 'output window, operand 0, single buffered']
    #allocation4 [shape = 's32[1]{0}', space=sflag, size = 0x4, scoped, tag = 'scoped memory for tpu_custom_call.1']
    %10 = vsyncpa [#allocation4], 0
    // Predicated region
    $region2: #{tpu_custom_call.1} parent=1 // pred_check
      _
    $region3: #{tpu_custom_call.1} parent=1 // pred_check_branch
      %12 = sbr.rel (0) target = $region5
    $region4: #{tpu_custom_call.1} parent=1 // pred_region
      _
    $region5: #{tpu_custom_call.1} parent=1 // pred_fallthru
      _
    // Predicated region
    $region6: #{tpu_custom_call.1} parent=1 // pred_check
      _
    $region7: #{tpu_custom_call.1} parent=1 // pred_check_branch
      %14 = sbr.rel (0) target = $region9
    $region8: #{tpu_custom_call.1} parent=1 // pred_region
      _
    $region9: #{tpu_custom_call.1} parent=1 // pred_fallthru
      _
    // Predicated region
    $region10: #{tpu_custom_call.1} parent=1 // pred_check
      _
    $region11: #{tpu_custom_call.1} parent=1 // pred_check_branch
      %16 = sbr.rel (0) target = $region13
    $region12: #{tpu_custom_call.1} parent=1 // pred_region
      _
    $region13: #{tpu_custom_call.1} parent=1 // pred_fallthru
      _
    %v17 = vld [vmem:[%s0] sm:$0xff]
    %v18 = vld [vmem:[%s0 + $0x8] sm:$0x3]
    %v19 = vld [vmem:[%s1] sm:$0xff]
    %v20 = vld [vmem:[%s1 + $0x8] sm:$0x3]
    %v21 = vld [vmem:[#allocation2] sm:$0x1]
    %23 = vset.pattern.permute.xlu0 0
    %24 = vperm.xlu0 %23, %v19
    %v25 = vpop.permute.xlu0 %24
    %28 = vset.pattern.permute.xlu0 0
    %29 = vperm.xlu0 %28, %v20
    %v30 = vpop.permute.xlu0 %29
    %v32 = vmul.f32 %v17, %v25
    %v33 = vmul.f32 %v18, %v30
    %vm34 = vcmask 1041408
    %v35 = vsel %vm34, %v33, 0.0
    %v36 = vadd.f32 %v32, %v35
    %v37 = vrot.slane %v36, 4
    %v38 = vadd.f32 %v36, %v37
    %v39 = vrot.slane %v38, 2
    %v40 = vadd.f32 %v38, %v39
    %v41 = vrot.slane %v40, 1
    %v42 = vadd.f32 %v40, %v41
    %44 = vset.pattern.permute.xlu0 0
    %45 = vperm.xlu0 %44, %v21
    %v46 = vpop.permute.xlu0 %45
    %v48 = vperm.slane %v46, 0
    %v49 = vadd.f32 %v42, %v48
    %50 = vst [vmem:[#allocation3] sm:$0x1] %v49
    // Predicated region
    $region14: #{tpu_custom_call.1} parent=1 // pred_check
      _
    $region15: #{tpu_custom_call.1} parent=1 // pred_check_branch
      %52 = sbr.rel (0) target = $region17
    $region16: #{tpu_custom_call.1} parent=1 // pred_region
      %54 = vsyncadd [#allocation4], 0
      %s56 = sshll.u32 [#allocation3], 4
      %s57 = int_to_ptr.vmem [resolvable:$true] %s56
      %s58 = sshll.u32 %s3, 4
      %s59 = int_to_ptr.hbm [resolvable:$true] %s58
      %61 = dma.vmem_to_hbm [thread:$0]  %s57, 16, %s59, [#allocation4]
    $region17: #{tpu_custom_call.1} parent=1 // pred_fallthru
      _
    // Predicated region
    $region18: #{tpu_custom_call.1} parent=1 // pred_check
      _
    $region19: #{tpu_custom_call.1} parent=1 // pred_check_branch
      %63 = sbr.rel (0) target = $region21
    $region20: #{tpu_custom_call.1} parent=1 // pred_region
      %65 = dma.done [#allocation4], 16
    $region21: #{tpu_custom_call.1} parent=1 // pred_fallthru
      _
    %66 = vsyncpa [#allocation4], 1

</llo_original>
